<compile_context>
chip_gen: v7x
topology: tpu7x:2x2x1
jax: 0.10.0
libtpu: 0.0.40
codegen_flags: <defaults>
</compile_context>

<pallas_src>
import jax
import jax.numpy as jnp
from jax import lax
from jax.experimental import pallas as pl
from jax.experimental.pallas import tpu as pltpu


def _shifted(x, delta, axis, idx):
    """y[..., i, ...] = x[..., i + delta, ...] along `axis`, zero-filled outside [0, size)."""
    size = x.shape[axis]
    tile = 128 if axis == x.ndim - 1 else 8
    if size % tile == 0:
        # XLU lane/sublane rotate + edge mask: no extra slab copies, runs off the VPU slot.
        y = pltpu.roll(x, (-delta) % size, axis)      # np.roll semantics: y[i] = x[i + delta]
        src = idx + delta
        keep = jnp.logical_and(src >= 0, src < size)
        return jnp.where(keep, y, 0.0)
    # Fallback (always lowers): static slice + concat with a zero strip.  Used when the axis
    # is not vreg-tile aligned (e.g. W=16 in the test); cost is hidden under HBM DMA.
    pad_shape = list(x.shape)
    pad_shape[axis] = abs(delta)
    zeros = jnp.zeros(pad_shape, x.dtype)
    if delta > 0:
        return jnp.concatenate([lax.slice_in_dim(x, delta, size, axis=axis), zeros], axis=axis)
    return jnp.concatenate([zeros, lax.slice_in_dim(x, 0, size + delta, axis=axis)], axis=axis)


def _frelu_kernel(x_ref, w_ref, b_ref, o_ref):
    # x_ref/o_ref: (Cb, H, W) VMEM block -- NCHW-native, W on lanes, H on sublanes.
    # w_ref: (9, C) SMEM -- BN-folded depthwise 3x3 taps, row k = kh*3 + kw.
    # b_ref: (C,)   SMEM -- BN-folded per-channel bias.
    cb, H, W = x_ref.shape
    c0 = pl.program_id(1) * cb

    # Hoisted once per grid step (JAX does not CSE broadcast_in_dim inside the loop).
    row_idx = lax.broadcasted_iota(jnp.int32, (H, W), 0)
    col_idx = lax.broadcasted_iota(jnp.int32, (H, W), 1)

    def body(c, carry):
        cg = c0 + c
        xf = x_ref[c].astype(jnp.float32)                 # (H, W), single up-cast

        # Width taps: x(h, w-1) and x(h, w+1), zero outside the image.
        x_wm = _shifted(xf, -1, 1, col_idx)
        x_wp = _shifted(xf, +1, 1, col_idx)

        w = [w_ref[k, cg] for k in range(9)]              # 9 SMEM scalars (BN-folded taps)
        r_top = w[0] * x_wm + w[1] * xf + w[2] * x_wp     # kernel row kh=0 -> x(h-1, .)
        r_mid = w[3] * x_wm + w[4] * xf + w[5] * x_wp     # kernel row kh=1 -> x(h,   .)
        r_bot = w[6] * x_wm + w[7] * xf + w[8] * x_wp     # kernel row kh=2 -> x(h+1, .)

        # t(h) = r_top(h-1) + r_mid(h) + r_bot(h+1) + bias, zero-padded outside [0, H).
        t = (r_mid + b_ref[cg]
             + _shifted(r_top, -1, 0, row_idx)
             + _shifted(r_bot, +1, 0, row_idx))

        # frelu = max(x, T(x)); max in f32, single cast at the store.
        o_ref[c] = jnp.maximum(xf, t).astype(o_ref.dtype)
        return carry

    lax.fori_loop(0, cb, body, 0)


def _pick_c_block(n, c, h, w, itemsize, vmem_budget):
    """Largest channel block s.t. double-buffered I/O + per-channel f32 temps fit the budget."""
    plane_io = h * w * itemsize            # one channel plane of x / out (HBM dtype)
    temps = 12 * h * w * 4                 # in-kernel per-channel f32 temporaries (+ iotas)
    avail = max(vmem_budget - temps, 4 * plane_io)
    cb_max = max(1, avail // (4 * plane_io))           # (in + out) x double buffer
    cb = max(d for d in range(1, c + 1) if c % d == 0 and d <= cb_max)
    # Keep >= 2 grid steps so the launch can split across TensorCores (v7x megacore).
    while n * (c // cb) < 2 and cb > 1:
        cb = max(d for d in range(1, cb) if c % d == 0)
    return cb


def frelu(x, w_dw, bn_gamma, bn_beta, bn_mean, bn_var, eps=1e-5, c_block=None):
    """x: (N, C, H, W); w_dw: (C, 3, 3) depthwise conv weights; BN params: (C,)."""
    N, C, H, W = x.shape

    # Fold BatchNorm (eval mode) into the conv: per-channel scale and additive bias.
    scale = bn_gamma / jnp.sqrt(bn_var + eps)                                   # (C,)
    w_eff = (w_dw * scale[:, None, None]).reshape(C, 9).T.astype(jnp.float32)   # (9, C)
    b_eff = (bn_beta - bn_mean * scale).astype(jnp.float32)                     # (C,)

    # VMEM budget per generation (v7x: 64 MiB/TC) instead of a hard-coded limit.
    try:
        vmem_cap = int(pltpu.get_tpu_info().vmem_capacity_bytes)
    except Exception:
        vmem_cap = 64 * 1024 * 1024          # conservative (v7x per-TensorCore capacity)
    vmem_budget = int(min(vmem_cap * 2 // 3, 96 * 1024 * 1024))

    if c_block is None:
        c_block = _pick_c_block(N, C, H, W, x.dtype.itemsize, vmem_budget)
    assert C % c_block == 0
    # Note: the block's last two dims are always the full (H, W), so any c_block that divides
    # C is legal w.r.t. the (8, 128) BlockSpec rule (c_block sits on a leading dim).

    in_io_spec = pl.BlockSpec((None, c_block, H, W), lambda n, j: (n, j, 0, 0))
    out_io_spec = pl.BlockSpec((None, c_block, H, W), lambda n, j: (n, j, 0, 0))
    smem_spec = pl.BlockSpec(memory_space=pltpu.MemorySpace.SMEM)

    return pl.pallas_call(
        _frelu_kernel,
        out_shape=jax.ShapeDtypeStruct((N, C, H, W), x.dtype),
        grid=(N, C // c_block),
        in_specs=[in_io_spec, smem_spec, smem_spec],
        out_specs=out_io_spec,
        compiler_params=pltpu.CompilerParams(
            dimension_semantics=("parallel", "parallel"),
            vmem_limit_bytes=vmem_budget,
        ),
    )(x, w_eff, b_eff)


def frelu_ref(x, w_dw, gamma, beta, mean, var, eps=1e-5):
    """Pure-JAX reference (matches PyTorch depthwise conv + eval BN + max)."""
    C = x.shape[1]
    w = w_dw[:, None, :, :]                                  # (C, 1, 3, 3) OIHW, groups=C
    y = lax.conv_general_dilated(
        x, w, window_strides=(1, 1), padding=((1, 1), (1, 1)),
        dimension_numbers=("NCHW", "OIHW", "NCHW"),
        feature_group_count=C)
    scale = gamma / jnp.sqrt(var + eps)
    y = y * scale[None, :, None, None] + (beta - mean * scale)[None, :, None, None]
    return jnp.maximum(x, y)


if __name__ == "__main__":
    key = jax.random.PRNGKey(0)
    k_x, k_w, k_g, k_b, k_m, k_v = jax.random.split(key, 6)

    N, C, H, W = 2, 4, 16, 16
    x = jax.random.normal(k_x, (N, C, H, W), dtype=jnp.float32)

    # Deterministic synthetic parameters (eval-mode BN, non-trivial stats).
    w_dw = jax.random.normal(k_w, (C, 3, 3), dtype=jnp.float32) / 3.0   # depthwise conv weight
    gamma = 1.0 + 0.1 * jax.random.normal(k_g, (C,), jnp.float32)       # BN weight
    beta = 0.1 * jax.random.normal(k_b, (C,), jnp.float32)              # BN bias
    mean = 0.1 * jax.random.normal(k_m, (C,), jnp.float32)              # BN running_mean
    var = jnp.abs(1.0 + 0.1 * jax.random.normal(k_v, (C,), jnp.float32))  # BN running_var

    out = jax.block_until_ready(frelu(x, w_dw, gamma, beta, mean, var))
    ref = frelu_ref(x, w_dw, gamma, beta, mean, var)
    max_err = float(jnp.max(jnp.abs(out - ref)))
    assert out.shape == (N, C, H, W) and out.dtype == x.dtype
    assert jnp.allclose(out, ref, atol=1e-5, rtol=1e-5), f"max_err={max_err}"
    print("KERNEL_OK")
</pallas_src>

<mosaic_0001>
module attributes {stable_mosaic.version = 11 : i64} {
  func.func @_frelu_kernel(%arg0: i32, %arg1: i32, %arg2: memref<1x4x16x16xf32, #tpu.memory_space<vmem>>, %arg3: memref<9x4xf32, #tpu.memory_space<smem>>, %arg4: memref<4xf32, #tpu.memory_space<smem>>, %arg5: memref<1x4x16x16xf32, #tpu.memory_space<vmem>>) attributes {dimension_semantics = [#tpu.dimension_semantics<parallel>, #tpu.dimension_semantics<parallel>], iteration_bounds = array<i64: 2, 1>, scalar_prefetch = 0 : i64, scratch_operands = 0 : i64, tpu.core_type = #tpu.core_type<tc>, window_params = [{transform_indices = @transform_0, window_bounds = array<i64: 1, 4, 16, 16>}, {transform_indices = @transform_1, window_bounds = array<i64: 9, 4>}, {transform_indices = @transform_2, window_bounds = array<i64: 4>}, {transform_indices = @transform_3, window_bounds = array<i64: 1, 4, 16, 16>}]} {
    %c4_i32 = arith.constant 4 : i32
    %0 = arith.muli %arg1, %c4_i32 : i32
    %1 = tpu.iota {dimensions = array<i32: 0>} : vector<16x16xi32>
    %c0_i32 = arith.constant 0 : i32
    %c4_i32_0 = arith.constant 4 : i32
    %2 = arith.addi %c0_i32, %c4_i32_0 : i32
    %c1_i32 = arith.constant 1 : i32
    scf.for %arg6 = %c0_i32 to %2 step %c1_i32  : i32 {
      %3 = arith.addi %0, %arg6 : i32
      %c0 = arith.constant 0 : index
      %4 = arith.index_cast %arg6 : i32 to index
      %c0_2 = arith.constant 0 : index
      %c0_3 = arith.constant 0 : index
      %5 = vector.load %arg2[%c0, %4, %c0_2, %c0_3] : memref<1x4x16x16xf32, #tpu.memory_space<vmem>>, vector<1x1x16x16xf32>
      %6 = vector.shape_cast %5 : vector<1x1x16x16xf32> to vector<16x16xf32>
      %cst = arith.constant 0.000000e+00 : f32
      %7 = vector.broadcast %cst : f32 to vector<16x1xf32>
      %8 = vector.extract_strided_slice %6 {offsets = [0, 0], sizes = [16, 15], strides = [1, 1]} : vector<16x16xf32> to vector<16x15xf32>
      %9 = tpu.concatenate %7, %8 in 1 : vector<16x1xf32>, vector<16x15xf32> -> vector<16x16xf32>
      %cst_4 = arith.constant 0.000000e+00 : f32
      %10 = vector.broadcast %cst_4 : f32 to vector<16x1xf32>
      %11 = vector.extract_strided_slice %6 {offsets = [0, 1], sizes = [16, 15], strides = [1, 1]} : vector<16x16xf32> to vector<16x15xf32>
      %12 = tpu.concatenate %11, %10 in 1 : vector<16x15xf32>, vector<16x1xf32> -> vector<16x16xf32>
      %c0_5 = arith.constant 0 : index
      %13 = arith.index_cast %3 : i32 to index
      %14 = memref.load %arg3[%c0_5, %13] : memref<9x4xf32, #tpu.memory_space<smem>>
      %c1 = arith.constant 1 : index
      %15 = arith.index_cast %3 : i32 to index
      %16 = memref.load %arg3[%c1, %15] : memref<9x4xf32, #tpu.memory_space<smem>>
      %c2 = arith.constant 2 : index
      %17 = arith.index_cast %3 : i32 to index
      %18 = memref.load %arg3[%c2, %17] : memref<9x4xf32, #tpu.memory_space<smem>>
      %c3 = arith.constant 3 : index
      %19 = arith.index_cast %3 : i32 to index
      %20 = memref.load %arg3[%c3, %19] : memref<9x4xf32, #tpu.memory_space<smem>>
      %c4 = arith.constant 4 : index
      %21 = arith.index_cast %3 : i32 to index
      %22 = memref.load %arg3[%c4, %21] : memref<9x4xf32, #tpu.memory_space<smem>>
      %c5 = arith.constant 5 : index
      %23 = arith.index_cast %3 : i32 to index
      %24 = memref.load %arg3[%c5, %23] : memref<9x4xf32, #tpu.memory_space<smem>>
      %c6 = arith.constant 6 : index
      %25 = arith.index_cast %3 : i32 to index
      %26 = memref.load %arg3[%c6, %25] : memref<9x4xf32, #tpu.memory_space<smem>>
      %c7 = arith.constant 7 : index
      %27 = arith.index_cast %3 : i32 to index
      %28 = memref.load %arg3[%c7, %27] : memref<9x4xf32, #tpu.memory_space<smem>>
      %c8 = arith.constant 8 : index
      %29 = arith.index_cast %3 : i32 to index
      %30 = memref.load %arg3[%c8, %29] : memref<9x4xf32, #tpu.memory_space<smem>>
      %31 = vector.broadcast %14 : f32 to vector<16x16xf32>
      %32 = arith.mulf %31, %9 : vector<16x16xf32>
      %33 = vector.broadcast %16 : f32 to vector<16x16xf32>
      %34 = arith.mulf %33, %6 : vector<16x16xf32>
      %35 = arith.addf %32, %34 : vector<16x16xf32>
      %36 = vector.broadcast %18 : f32 to vector<16x16xf32>
      %37 = arith.mulf %36, %12 : vector<16x16xf32>
      %38 = arith.addf %35, %37 : vector<16x16xf32>
      %39 = vector.broadcast %20 : f32 to vector<16x16xf32>
      %40 = arith.mulf %39, %9 : vector<16x16xf32>
      %41 = vector.broadcast %22 : f32 to vector<16x16xf32>
      %42 = arith.mulf %41, %6 : vector<16x16xf32>
      %43 = arith.addf %40, %42 : vector<16x16xf32>
      %44 = vector.broadcast %24 : f32 to vector<16x16xf32>
      %45 = arith.mulf %44, %12 : vector<16x16xf32>
      %46 = arith.addf %43, %45 : vector<16x16xf32>
      %47 = vector.broadcast %26 : f32 to vector<16x16xf32>
      %48 = arith.mulf %47, %9 : vector<16x16xf32>
      %49 = vector.broadcast %28 : f32 to vector<16x16xf32>
      %50 = arith.mulf %49, %6 : vector<16x16xf32>
      %51 = arith.addf %48, %50 : vector<16x16xf32>
      %52 = vector.broadcast %30 : f32 to vector<16x16xf32>
      %53 = arith.mulf %52, %12 : vector<16x16xf32>
      %54 = arith.addf %51, %53 : vector<16x16xf32>
      %55 = arith.index_cast %3 : i32 to index
      %56 = memref.load %arg4[%55] : memref<4xf32, #tpu.memory_space<smem>>
      %57 = vector.broadcast %56 : f32 to vector<16x16xf32>
      %58 = arith.addf %46, %57 : vector<16x16xf32>
      %c1_i32_6 = arith.constant 1 : i32
      %59 = tpu.dynamic_rotate %38 by %c1_i32_6 dim 0 : vector<16x16xf32>, i32 -> vector<16x16xf32>
      %c-1_i32 = arith.constant -1 : i32
      %60 = vector.broadcast %c-1_i32 : i32 to vector<16x16xi32>
      %61 = arith.addi %1, %60 : vector<16x16xi32>
      %c0_i32_7 = arith.constant 0 : i32
      %62 = vector.broadcast %c0_i32_7 : i32 to vector<16x16xi32>
      %63 = arith.cmpi sge, %61, %62 : vector<16x16xi32>
      %c16_i32 = arith.constant 16 : i32
      %64 = vector.broadcast %c16_i32 : i32 to vector<16x16xi32>
      %65 = arith.cmpi slt, %61, %64 : vector<16x16xi32>
      %66 = arith.andi %63, %65 : vector<16x16xi1>
      %cst_8 = arith.constant 0.000000e+00 : f32
      %67 = vector.broadcast %cst_8 : f32 to vector<16x16xf32>
      %68 = arith.select %66, %59, %67 : vector<16x16xi1>, vector<16x16xf32>
      %69 = arith.addf %58, %68 : vector<16x16xf32>
      %c15_i32 = arith.constant 15 : i32
      %70 = tpu.dynamic_rotate %54 by %c15_i32 dim 0 : vector<16x16xf32>, i32 -> vector<16x16xf32>
      %c1_i32_9 = arith.constant 1 : i32
      %71 = vector.broadcast %c1_i32_9 : i32 to vector<16x16xi32>
      %72 = arith.addi %1, %71 : vector<16x16xi32>
      %c0_i32_10 = arith.constant 0 : i32
      %73 = vector.broadcast %c0_i32_10 : i32 to vector<16x16xi32>
      %74 = arith.cmpi sge, %72, %73 : vector<16x16xi32>
      %c16_i32_11 = arith.constant 16 : i32
      %75 = vector.broadcast %c16_i32_11 : i32 to vector<16x16xi32>
      %76 = arith.cmpi slt, %72, %75 : vector<16x16xi32>
      %77 = arith.andi %74, %76 : vector<16x16xi1>
      %cst_12 = arith.constant 0.000000e+00 : f32
      %78 = vector.broadcast %cst_12 : f32 to vector<16x16xf32>
      %79 = arith.select %77, %70, %78 : vector<16x16xi1>, vector<16x16xf32>
      %80 = arith.addf %69, %79 : vector<16x16xf32>
      %81 = arith.maximumf %6, %80 : vector<16x16xf32>
      %c0_13 = arith.constant 0 : index
      %82 = arith.index_cast %arg6 : i32 to index
      %c0_14 = arith.constant 0 : index
      %c0_15 = arith.constant 0 : index
      %83 = vector.load %arg5[%c0_13, %82, %c0_14, %c0_15] : memref<1x4x16x16xf32, #tpu.memory_space<vmem>>, vector<1x1x16x16xf32>
      %84 = vector.shape_cast %83 : vector<1x1x16x16xf32> to vector<16x16xf32>
      %85 = vector.shape_cast %81 : vector<16x16xf32> to vector<1x1x16x16xf32>
      tpu.vector_store %arg5[%c0_13, %82, %c0_14, %c0_15], %85 {strides = array<i32>} : memref<1x4x16x16xf32, #tpu.memory_space<vmem>>, vector<1x1x16x16xf32>,
    }
    %c4_i32_1 = arith.constant 4 : i32
    return
  }
  func.func @transform_0(%arg0: i32, %arg1: i32) -> (i32, i32, i32, i32) {
    %c0_i32 = arith.constant 0 : i32
    %c0_i32_0 = arith.constant 0 : i32
    %c0_i32_1 = arith.constant 0 : i32
    return %arg0, %arg1, %c0_i32, %c0_i32_0 : i32, i32, i32, i32
  }
  func.func @transform_1(%arg0: i32, %arg1: i32) -> (i32, i32) {
    %c0_i32 = arith.constant 0 : i32
    %c0_i32_0 = arith.constant 0 : i32
    %c0_i32_1 = arith.constant 0 : i32
    return %c0_i32, %c0_i32_0 : i32, i32
  }
  func.func @transform_2(%arg0: i32, %arg1: i32) -> i32 {
    %c0_i32 = arith.constant 0 : i32
    %c0_i32_0 = arith.constant 0 : i32
    return %c0_i32 : i32
  }
  func.func @transform_3(%arg0: i32, %arg1: i32) -> (i32, i32, i32, i32) {
    %c0_i32 = arith.constant 0 : i32
    %c0_i32_0 = arith.constant 0 : i32
    %c0_i32_1 = arith.constant 0 : i32
    return %arg0, %arg1, %c0_i32, %c0_i32_0 : i32, i32, i32, i32
  }
}

</mosaic_0001>

<llo_original>
// kernel: tpu_custom_call.1
$region0: #{tpu_custom_call.1}
  #allocation0 [shape = 'u32[]', space=smem, size = 0x4, offset = 0x4, fixed_abs, tag = 'smem constant byte address 0x4 - core index']
  #allocation1 [shape = 'u32[144,128]{1,0:T(1,128)}', space=vmem, size = 0x12000, scoped, tag = 'internal scratch']
  %s0 = inlined_call_operand.hbm [shape: f32[2,4,16,16], index: 0, kind: input, shape index: {}]
  %s1 = inlined_call_operand.vmem [shape: f32[9,4], index: 1, kind: input, shape index: {}]
  %s2 = inlined_call_operand.vmem [shape: f32[4], index: 2, kind: input, shape index: {}]
  %s3 = inlined_call_operand.hbm [shape: f32[2,4,16,16], index: 3, kind: output, shape index: {}]
  %s4 = sld [smem:[#allocation0]]
  $region64: #{tpu_custom_call.1} parent=0
    _
  %s6 = ssub.s32 1, %s4
  %s7 = scalar_select 0, %s6, %s4
  $region1: #{tpu_custom_call.1} parent=0
    #allocation2 [shape = 'u8[65536]{0}', space=vmem, size = 0x10000, scoped, tag = 'input window, operand 0']
    #allocation3 [shape = 's32[2]{0}', space=sflag, size = 0x8, scoped, tag = 'scoped memory for tpu_custom_call.1']
    #allocation4 [shape = 's32[2]{0}', space=sflag, size = 0x8, scoped, tag = 'scoped memory for tpu_custom_call.1']
    #allocation5 [shape = 's32[2]{0}', space=sflag, size = 0x8, scoped, tag = 'scoped memory for tpu_custom_call.1']
    #allocation6 [shape = 'u8[8192]{0}', space=smem, size = 0x2000, scoped, tag = 'input window, operand 1, single buffered']
    #allocation7 [shape = 'u8[512]{0}', space=smem, size = 0x200, scoped, tag = 'input window, operand 2, single buffered']
    #allocation8 [shape = 's32[1]{0}', space=sflag, size = 0x4, scoped, tag = 'scoped memory for tpu_custom_call.1']
    #allocation9 [shape = 'u8[65536]{0}', space=vmem, size = 0x10000, scoped, tag = 'output window, operand 0']
    %8 = vsyncpa [#allocation3], 0
    %s9 = scalar_lea.sflag [#allocation3], 1
    %10 = vsyncpa %s9, 0
    %11 = vsyncpa [#allocation5], 0
    %12 = vsyncpa [#allocation8], 0
    %13 = vsyncpa [#allocation4], 0
    %s14 = scalar_lea.sflag [#allocation4], 1
    %15 = vsyncpa %s14, 0
    loop: start=0, step=1, limit=4
    $region2: #{tpu_custom_call.1} parent=1 // loop_pre_header
      _
    $region3: #{tpu_custom_call.1} parent=1 // loop_header
      %s17 = sphi 0, %s21
      %p18 = scmp.ge.s32.totalorder %s17, 4
      %s24 = sphi 0, %s36
      %s25 = sphi 0, %s32
      %s26 = sphi 0, %s24
      %s27 = sphi 0, %s25
      %s28 = sphi 0, %s26
      %s29 = sphi 0, %s27
      %s41 = sphi 0, %s43
      %s44 = sphi 0, %s41
      %s45 = sphi 0, %s44
      %s61 = sphi 0, %s45
      %s65 = sphi 0, %s65
      %s67 = sphi 0, %s65
      %s68 = sphi 0, %s67
      %s82 = sphi 0, %s68
      %s86 = sphi 0, %s86
      %s88 = sphi 0, %s86
      %s89 = sphi 0, %s88
      %s103 = sphi 0, %s89
      %s111 = sphi 0, %s113
      %s114 = sphi 0, %s111
      %s115 = sphi 0, %s114
      %s131 = sphi 0, %s115
    $region4: #{tpu_custom_call.1} parent=1 // loop_header_branch
      %20 = sbr.rel (%p18) target = $region8
    $region5: #{tpu_custom_call.1} parent=1 // loop_body
      %s22 = ssub.s32 %s17, 1
      %s23 = ssub.s32 %s17, 2
      %s30 = sadd.s32 1, %s25
      %p31 = scmp.ge.s32.totalorder %s30, 1
      %s32 = scalar_select %p31, 0, %s30
      %s33 = sadd.s32 1, %s24
      %s34 = scalar_select %p31, %s33, %s24
      %p35 = scmp.ge.s32.totalorder %s34, 2
      %s36 = scalar_select %p35, 0, %s34
      %s37 = ssub.s32 %s24, %s36
      %s38 = ssub.s32 %s25, %s32
      %s39 = sor.u32 %s37, %s38
      %p40 = scmp.eq.s32.totalorder %s39, 0
      %s42 = sadd.s32 %s41, 1
      %s43 = scalar_select %p40, %s41, %s42
      %p46 = pneg %p40
      %p47 = scmp.eq.s32.totalorder %s17, 1
      %p48 = por %p46, %p47
      %p49 = scmp.ne.s32.totalorder %s41, %s44
      %p50 = scmp.eq.s32.totalorder %s17, 0
      %p51 = por %p49, %p50
      %p52 = scmp.ne.s32.totalorder %s41, %s44
      %p53 = scmp.eq.s32.totalorder %s22, 1
      %p54 = por %p52, %p53
      %p55 = scmp.ne.s32.totalorder %s44, %s45
      %p56 = scmp.eq.s32.totalorder %s22, 0
      %p57 = por %p55, %p56
      %p58 = scmp.ne.s32.totalorder %s44, %s45
      %p59 = scmp.eq.s32.totalorder %s23, 1
      %p60 = por %p58, %p59
      %p62 = scmp.ne.s32.totalorder %s45, %s61
      %p63 = scmp.eq.s32.totalorder %s23, 0
      %p64 = por %p62, %p63
      %s66 = sadd.s32 %s65, 1
      %p69 = scmp.eq.s32.totalorder %s17, 1
      %p70 = scmp.ne.s32.totalorder %s65, %s67
      %p71 = scmp.eq.s32.totalorder %s17, 0
      %p72 = por %p70, %p71
      %p73 = scmp.ne.s32.totalorder %s65, %s67
      %p74 = scmp.eq.s32.totalorder %s22, 1
      %p75 = por %p73, %p74
      %p76 = scmp.ne.s32.totalorder %s67, %s68
      %p77 = scmp.eq.s32.totalorder %s22, 0
      %p78 = por %p76, %p77
      %p79 = scmp.ne.s32.totalorder %s67, %s68
      %p80 = scmp.eq.s32.totalorder %s23, 1
      %p81 = por %p79, %p80
      %p83 = scmp.ne.s32.totalorder %s68, %s82
      %p84 = scmp.eq.s32.totalorder %s23, 0
      %p85 = por %p83, %p84
      %s87 = sadd.s32 %s86, 1
      %p90 = scmp.eq.s32.totalorder %s17, 1
      %p91 = scmp.ne.s32.totalorder %s86, %s88
      %p92 = scmp.eq.s32.totalorder %s17, 0
      %p93 = por %p91, %p92
      %p94 = scmp.ne.s32.totalorder %s86, %s88
      %p95 = scmp.eq.s32.totalorder %s22, 1
      %p96 = por %p94, %p95
      %p97 = scmp.ne.s32.totalorder %s88, %s89
      %p98 = scmp.eq.s32.totalorder %s22, 0
      %p99 = por %p97, %p98
      %p100 = scmp.ne.s32.totalorder %s88, %s89
      %p101 = scmp.eq.s32.totalorder %s23, 1
      %p102 = por %p100, %p101
      %p104 = scmp.ne.s32.totalorder %s89, %s103
      %p105 = scmp.eq.s32.totalorder %s23, 0
      %p106 = por %p104, %p105
      %s107 = ssub.s32 %s24, %s36
      %s108 = ssub.s32 %s25, %s32
      %s109 = sor.u32 %s107, %s108
      %p110 = scmp.eq.s32.totalorder %s109, 0
      %s112 = sadd.s32 %s111, 1
      %s113 = scalar_select %p110, %s111, %s112
      %p116 = pneg %p110
      %p117 = scmp.eq.s32.totalorder %s17, 1
      %p118 = por %p116, %p117
      %p119 = scmp.ne.s32.totalorder %s111, %s114
      %p120 = scmp.eq.s32.totalorder %s17, 0
      %p121 = por %p119, %p120
      %p122 = scmp.ne.s32.totalorder %s111, %s114
      %p123 = scmp.eq.s32.totalorder %s22, 1
      %p124 = por %p122, %p123
      %p125 = scmp.ne.s32.totalorder %s114, %s115
      %p126 = scmp.eq.s32.totalorder %s22, 0
      %p127 = por %p125, %p126
      %p128 = scmp.ne.s32.totalorder %s114, %s115
      %p129 = scmp.eq.s32.totalorder %s23, 1
      %p130 = por %p128, %p129
      %p132 = scmp.ne.s32.totalorder %s115, %s131
      %p133 = scmp.eq.s32.totalorder %s23, 0
      %p134 = por %p132, %p133
      %p135 = scmp.le.s32.totalorder 1, %s17
      %p136 = scmp.lt.s32.totalorder %s17, 3
      %p137 = pnand %p135, %p136
      %p138 = pneg %p137
      // Predicated region
      $region9: #{tpu_custom_call.1} parent=5 // pred_check
        _
      $region10: #{tpu_custom_call.1} parent=5 // pred_check_branch
        %140 = sbr.rel (%p137) target = $region12
      $region11: #{tpu_custom_call.1} parent=5 // pred_region
        %s141 = ssub.s32 %s17, 1
        // Predicated region
        $region13: #{tpu_custom_call.1} parent=11 // pred_check
          %p142 = pneg %p78
        $region14: #{tpu_custom_call.1} parent=11 // pred_check_branch
          %144 = sbr.rel (%p142) target = $region16
        $region15: #{tpu_custom_call.1} parent=11 // pred_region
          %s146 = ssub.s32 256, 256
          %147 = vsyncadd [#allocation5], %s146
          %s148 = sshll.u32 %s1, 4
          %s149 = int_to_ptr.vmem [resolvable:$true] %s148
          %154 = dma.vmem_to_smem %s149, 256, [#allocation6], [#allocation5], 128, 128, 8
        $region16: #{tpu_custom_call.1} parent=11 // pred_fallthru
          _
        // Predicated region
        $region17: #{tpu_custom_call.1} parent=11 // pred_check
          %p155 = pneg %p99
        $region18: #{tpu_custom_call.1} parent=11 // pred_check_branch
          %157 = sbr.rel (%p155) target = $region20
        $region19: #{tpu_custom_call.1} parent=11 // pred_region
          %s159 = ssub.s32 16, 16
          %160 = vsyncadd [#allocation8], %s159
          %s162 = sshll.u32 %s2, 4
          %s163 = int_to_ptr.vmem [resolvable:$true] %s162
          %165 = dma.vmem_to_smem %s163, 16, [#allocation7], [#allocation8]
        $region20: #{tpu_custom_call.1} parent=11 // pred_fallthru
          _
      $region12: #{tpu_custom_call.1} parent=5 // pred_fallthru
        _
      %p166 = scmp.lt.s32.totalorder %s17, 2
      // Predicated region
      $region21: #{tpu_custom_call.1} parent=5 // pred_check
        %p167 = pneg %p166
      $region22: #{tpu_custom_call.1} parent=5 // pred_check_branch
        %169 = sbr.rel (%p167) target = $region24
      $region23: #{tpu_custom_call.1} parent=5 // pred_region
        // Predicated region
        $region25: #{tpu_custom_call.1} parent=23 // pred_check
          %p170 = pneg %p51
        $region26: #{tpu_custom_call.1} parent=23 // pred_check_branch
          %172 = sbr.rel (%p170) target = $region28
        $region27: #{tpu_custom_call.1} parent=23 // pred_region
          %s173 = sand.u32 %s41, 1
          %s174 = scalar_lea.sflag [#allocation3], %s173
          %s175 = sand.u32 %s41, 1
          %s176 = smul.addr %s175, 64
          %s177 = scalar_lea.vmem [#allocation2], %s176
          %s178 = smul.u32 4, %s25
          %s180 = ssub.s32 1024, 1024
          %181 = vsyncadd %s174, %s180
          %s182 = smul.addr %s178, 2
          %s183 = smul.addr %s24, 8
          %s184 = sadd.s32 %s182, %s183
          %s185 = smul.addr %s184, 128
          %s186 = scalar_lea.hbm %s0, %s185
          %s187 = sshll.u32 %s177, 4
          %s188 = int_to_ptr.vmem [resolvable:$true] %s187
          %193 = dma.hbm_to_vmem [thread:$0]  %s186, 1024, %s188, %s174, 128, 128, 8
        $region28: #{tpu_custom_call.1} parent=23 // pred_fallthru
          _
      $region24: #{tpu_custom_call.1} parent=5 // pred_fallthru
        _
      %p194 = scmp.le.s32.totalorder 1, %s17
      %p195 = scmp.lt.s32.totalorder %s17, 3
      %p196 = pnand %p194, %p195
      %p197 = pneg %p196
      // Predicated region
      $region29: #{tpu_custom_call.1} parent=5 // pred_check
        _
      $region30: #{tpu_custom_call.1} parent=5 // pred_check_branch
        %199 = sbr.rel (%p196) target = $region32
      $region31: #{tpu_custom_call.1} parent=5 // pred_region
        %s200 = ssub.s32 %s17, 1
        %s201 = sand.u32 %s44, 1
        %s202 = scalar_lea.sflag [#allocation3], %s201
        %s203 = sand.u32 %s44, 1
        %s204 = smul.addr %s203, 64
        %s205 = scalar_lea.vmem [#allocation2], %s204
        // Predicated region
        $region33: #{tpu_custom_call.1} parent=31 // pred_check
          %p206 = pneg %p57
        $region34: #{tpu_custom_call.1} parent=31 // pred_check_branch
          %208 = sbr.rel (%p206) target = $region36
        $region35: #{tpu_custom_call.1} parent=31 // pred_region
          %209 = dma.done %s202, 1024
        $region36: #{tpu_custom_call.1} parent=31 // pred_fallthru
          _
        // Predicated region
        $region37: #{tpu_custom_call.1} parent=31 // pred_check
          %p210 = pneg %p78
        $region38: #{tpu_custom_call.1} parent=31 // pred_check_branch
          %212 = sbr.rel (%p210) target = $region40
        $region39: #{tpu_custom_call.1} parent=31 // pred_region
          %213 = dma.done [#allocation5], 256
        $region40: #{tpu_custom_call.1} parent=31 // pred_fallthru
          _
        // Predicated region
        $region41: #{tpu_custom_call.1} parent=31 // pred_check
          %p214 = pneg %p99
        $region42: #{tpu_custom_call.1} parent=31 // pred_check_branch
          %216 = sbr.rel (%p214) target = $region44
        $region43: #{tpu_custom_call.1} parent=31 // pred_region
          %217 = dma.done [#allocation8], 16
        $region44: #{tpu_custom_call.1} parent=31 // pred_fallthru
          _
        %218 = sfence
        %s219 = sand.u32 %s44, 1
        %s220 = scalar_lea.sflag [#allocation3], %s219
        %s221 = sand.u32 %s44, 1
        %s222 = smul.addr %s221, 64
        %s223 = scalar_lea.vmem [#allocation2], %s222
        %p224 = pneg %p57
        %p225 = pneg %p54
        %p226 = pneg %p78
        %p227 = pneg %p75
        %p228 = pneg %p99
        %p229 = pneg %p96
        %p230 = pneg %p127
        %p231 = pneg %p124
        %s232 = sand.u32 %s114, 1
        %s233 = scalar_lea.sflag [#allocation4], %s232
        %s234 = sand.u32 %s114, 1
        %s235 = smul.addr %s234, 64
        %s236 = scalar_lea.vmem [#allocation9], %s235
        %s237 = smul.u32 4, %s27
        %s238 = smul.u32 4, %s27
        %s239 = smul.u32 %s27, 4
        %v240 = vlaneseq
        %v241 = vshrl.u32 %v240, 7
        %v242 = vadd.s32 %v241, 8
        loop: start=0, step=1, limit=4
        $region45: #{tpu_custom_call.1} parent=31 // loop_pre_header
          _
        $region46: #{tpu_custom_call.1} parent=31 // loop_header
          %s244 = sphi 0, %s248
          %p245 = scmp.ge.s32.totalorder %s244, 4
        $region47: #{tpu_custom_call.1} parent=31 // loop_header_branch
          %247 = sbr.rel (%p245) target = $region51
        $region48: #{tpu_custom_call.1} parent=31 // loop_body
          %s249 = sadd.s32 %s239, %s244
          %s250 = smul.u32 %s244, 16
          %s251 = scalar_lea.vmem %s205, %s250 [#allocation2]
          %v252 = vld [vmem:[%s251] sm:$0xff]
          %v253 = vld [vmem:[%s251 + $0x8] sm:$0xff]
          %256 = vrot.lane.b32.xlu0 %v252, 1
          %v257 = vpop.permute.xlu0 %256
          %258 = vrot.lane.b32.xlu0 %v253, 1
          %v259 = vpop.permute.xlu0 %258
          %vm262 = vcmask 7168
          %v263 = vsel %vm262, 0.0, %v257
          %v264 = vsel %vm262, 0.0, %v259
          %265 = vrot.lane.b32.xlu0 %v252, 127
          %v266 = vpop.permute.xlu0 %265
          %267 = vrot.lane.b32.xlu0 %v253, 127
          %v268 = vpop.permute.xlu0 %267
          %vm271 = vcmask 121856
          %v272 = vsel %vm271, %v266, 0.0
          %v273 = vsel %vm271, %v268, 0.0
          %s274 = sld [smem:[#allocation6 + %s249]]
          %s275 = sshra.s32 %s249, 7
          %s276 = sand.u32 %s249, 127
          %s277 = sadd.s32 %s275, 1
          %s278 = smul.u32 %s277, 128
          %s279 = sshra.s32 %s249, 7
          %s280 = sand.u32 %s249, 127
          %s281 = sadd.s32 %s278, %s280
          %s282 = sld [smem:[#allocation6 + %s281]]
          %s283 = sadd.s32 %s275, 2
          %s284 = smul.u32 %s283, 128
          %s285 = sadd.s32 %s284, %s280
          %s286 = sld [smem:[#allocation6 + %s285]]
          %s287 = sadd.s32 %s275, 3
          %s288 = smul.u32 %s287, 128
          %s289 = sadd.s32 %s288, %s280
          %s290 = sld [smem:[#allocation6 + %s289]]
          %s291 = sadd.s32 %s275, 4
          %s292 = smul.u32 %s291, 128
          %s293 = sadd.s32 %s292, %s280
          %s294 = sld [smem:[#allocation6 + %s293]]
          %s295 = sadd.s32 %s275, 5
          %s296 = smul.u32 %s295, 128
          %s297 = sadd.s32 %s296, %s280
          %s298 = sld [smem:[#allocation6 + %s297]]
          %s299 = sadd.s32 %s275, 6
          %s300 = smul.u32 %s299, 128
          %s301 = sadd.s32 %s300, %s280
          %s302 = sld [smem:[#allocation6 + %s301]]
          %s303 = sadd.s32 %s275, 7
          %s304 = smul.u32 %s303, 128
          %s305 = sadd.s32 %s304, %s280
          %s306 = sld [smem:[#allocation6 + %s305]]
          %s307 = sadd.s32 %s275, 8
          %s308 = smul.u32 %s307, 128
          %s309 = sadd.s32 %s308, %s280
          %s310 = sld [smem:[#allocation6 + %s309]]
          %v311 = vstv %s274
          %v312 = vmul.f32 %v311, %v263
          %v313 = vmul.f32 %v311, %v264
          %v314 = vstv %s282
          %v315 = vmul.f32 %v314, %v252
          %v316 = vmul.f32 %v314, %v253
          %v317 = vadd.f32 %v312, %v315
          %v318 = vadd.f32 %v313, %v316
          %v319 = vstv %s286
          %v320 = vmul.f32 %v319, %v272
          %v321 = vmul.f32 %v319, %v273
          %v322 = vadd.f32 %v317, %v320
          %v323 = vadd.f32 %v318, %v321
          %v324 = vstv %s290
          %v325 = vmul.f32 %v324, %v263
          %v326 = vmul.f32 %v324, %v264
          %v327 = vstv %s294
          %v328 = vmul.f32 %v327, %v252
          %v329 = vmul.f32 %v327, %v253
          %v330 = vadd.f32 %v325, %v328
          %v331 = vadd.f32 %v326, %v329
          %v332 = vstv %s298
          %v333 = vmul.f32 %v332, %v272
          %v334 = vmul.f32 %v332, %v273
          %v335 = vadd.f32 %v330, %v333
          %v336 = vadd.f32 %v331, %v334
          %v337 = vstv %s302
          %v338 = vmul.f32 %v337, %v263
          %v339 = vmul.f32 %v337, %v264
          %v340 = vstv %s306
          %v341 = vmul.f32 %v340, %v252
          %v342 = vmul.f32 %v340, %v253
          %v343 = vadd.f32 %v338, %v341
          %v344 = vadd.f32 %v339, %v342
          %v345 = vstv %s310
          %v346 = vmul.f32 %v345, %v272
          %v347 = vmul.f32 %v345, %v273
          %v348 = vadd.f32 %v343, %v346
          %v349 = vadd.f32 %v344, %v347
          %s350 = sld [smem:[#allocation7 + %s249]]
          %v351 = vstv %s350
          %v352 = vadd.f32 %v335, %v351
          %v353 = vadd.f32 %v336, %v351
          %v354 = vrot.slane %v322, 7
          %v355 = vrot.slane %v323, 7
          %vm356 = vcmp.lt.s32.totalorder %v241, 1
          %v357 = vsel %vm356, %v354, %v355
          %v358 = vsel %vm356, %v355, %v354
          %v359 = vadd.s32 %v241, 4294967295
          %v360 = vadd.s32 %v242, 4294967295
          %vm361 = vcmp.ge.s32.totalorder %v359, 0
          %vm362 = vcmp.ge.s32.totalorder %v360, 0
          %vm363 = vcmp.lt.s32.totalorder %v359, 16
          %vm364 = vcmp.lt.s32.totalorder %v360, 16
          %vm365 = vmand %vm361, %vm363
          %vm366 = vmand %vm362, %vm364
          %v367 = vsel %vm365, %v358, 0.0
          %v368 = vsel %vm366, %v357, 0.0
          %v369 = vadd.f32 %v352, %v367
          %v370 = vadd.f32 %v353, %v368
          %v371 = vrot.slane %v348, 1
          %v372 = vrot.slane %v349, 1
          %vm373 = vcmp.lt.s32.totalorder %v241, 7
          %v374 = vsel %vm373, %v371, %v372
          %v375 = vsel %vm373, %v372, %v371
          %v376 = vadd.s32 %v241, 1
          %v377 = vadd.s32 %v242, 1
          %vm378 = vcmp.ge.s32.totalorder %v376, 0
          %vm379 = vcmp.ge.s32.totalorder %v377, 0
          %vm380 = vcmp.lt.s32.totalorder %v376, 16
          %vm381 = vcmp.lt.s32.totalorder %v377, 16
          %vm382 = vmand %vm378, %vm380
          %vm383 = vmand %vm379, %vm381
          %v384 = vsel %vm382, %v374, 0.0
          %v385 = vsel %vm383, %v375, 0.0
          %v386 = vadd.f32 %v369, %v384
          %v387 = vadd.f32 %v370, %v385
          %v388 = vmax.f32 %v252, %v386
          %v389 = vmax.f32 %v253, %v387
          %s390 = scalar_lea.vmem %s236, %s250 [#allocation9]
          %vm391 = vcmask 130048
          %392 = vst.msk [vmem:[%s390] sm:$0xff] %vm391, %v388
          %393 = vst.msk [vmem:[%s390 + $0x8] sm:$0xff] %vm391, %v389
        $region49: #{tpu_custom_call.1} parent=31 // loop_footer
          %s248 = sadd.s32 1, %s244
        $region50: #{tpu_custom_call.1} parent=31 // loop_footer_branch
          %243 = sbr.rel target = $region46
        $region51: #{tpu_custom_call.1} parent=31 // loop_exit
          _
        %s394 = sand.u32 %s114, 1
        %s395 = scalar_lea.sflag [#allocation4], %s394
        %s396 = sand.u32 %s114, 1
        %s397 = smul.addr %s396, 64
        %s398 = scalar_lea.vmem [#allocation9], %s397
        // Predicated region
        $region52: #{tpu_custom_call.1} parent=31 // pred_check
          %p399 = pneg %p124
        $region53: #{tpu_custom_call.1} parent=31 // pred_check_branch
          %401 = sbr.rel (%p399) target = $region55
        $region54: #{tpu_custom_call.1} parent=31 // pred_region
          %s402 = smul.u32 4, %s27
          %s404 = ssub.s32 1024, 1024
          %405 = vsyncadd %s395, %s404
          %s406 = smul.addr %s402, 2
          %s407 = smul.addr %s26, 8
          %s408 = sadd.s32 %s406, %s407
          %s409 = smul.addr %s408, 128
          %s410 = scalar_lea.hbm %s3, %s409
          %s411 = sshll.u32 %s398, 4
          %s412 = int_to_ptr.vmem [resolvable:$true] %s411
          %417 = dma.vmem_to_hbm [thread:$0]  %s412, 1024, %s410, %s395, 128, 128, 8
        $region55: #{tpu_custom_call.1} parent=31 // pred_fallthru
          _
      $region32: #{tpu_custom_call.1} parent=5 // pred_fallthru
        _
      %p418 = scmp.le.s32.totalorder 2, %s17
      // Predicated region
      $region56: #{tpu_custom_call.1} parent=5 // pred_check
        %p419 = pneg %p418
      $region57: #{tpu_custom_call.1} parent=5 // pred_check_branch
        %421 = sbr.rel (%p419) target = $region59
      $region58: #{tpu_custom_call.1} parent=5 // pred_region
        %s422 = ssub.s32 %s17, 2
        // Predicated region
        $region60: #{tpu_custom_call.1} parent=58 // pred_check
          %p423 = pneg %p130
        $region61: #{tpu_custom_call.1} parent=58 // pred_check_branch
          %425 = sbr.rel (%p423) target = $region63
        $region62: #{tpu_custom_call.1} parent=58 // pred_region
          %s426 = sand.u32 %s115, 1
          %s427 = scalar_lea.sflag [#allocation4], %s426
          %s428 = sand.u32 %s115, 1
          %s429 = smul.addr %s428, 64
          %s430 = scalar_lea.vmem [#allocation9], %s429
          %431 = dma.done %s427, 1024
        $region63: #{tpu_custom_call.1} parent=58 // pred_fallthru
          _
      $region59: #{tpu_custom_call.1} parent=5 // pred_fallthru
        _
    $region6: #{tpu_custom_call.1} parent=1 // loop_footer
      %s21 = sadd.s32 1, %s17
    $region7: #{tpu_custom_call.1} parent=1 // loop_footer_branch
      %16 = sbr.rel target = $region3
    $region8: #{tpu_custom_call.1} parent=1 // loop_exit
      _
    %432 = vsyncpa [#allocation3], 1
    %s433 = scalar_lea.sflag [#allocation3], 1
    %434 = vsyncpa %s433, 1
    %435 = vsyncpa [#allocation4], 1
    %s436 = scalar_lea.sflag [#allocation4], 1
    %437 = vsyncpa %s436, 1
    %438 = vsyncpa [#allocation5], 1
    %s439 = scalar_lea.sflag [#allocation5], 1
    %440 = vsyncpa %s439, 1
    %441 = vsyncpa [#allocation8], 1

</llo_original>
